<compile_context>
chip_gen: v6e
topology: v6e:2x2x1
jax: 0.10.0
libtpu: 0.0.40
codegen_flags: <defaults>
</compile_context>

<pallas_src>
import functools

import jax
import jax.numpy as jnp
from jax.experimental import pallas as pl
from jax.experimental.pallas import tpu as pltpu


def _round_up(x, m):
    return (x + m - 1) // m * m


def _cdiv(a, b):
    return (a + b - 1) // b


def _vmem_capacity_bytes():
    try:
        return int(pltpu.get_tpu_info().vmem_capacity_bytes)
    except Exception:
        return 128 * 1024 * 1024  # v5e/v6e default; v7x query returns 64 MiB/TC


_VMEM_CAP = _vmem_capacity_bytes()


def prepare_t5_ff_weights(wi_weight, wo_weight, compute_dtype=None):
    """One-time weight prep (do this at weight-load time, NOT per forward).

    wi_weight: (d_ff, d_model)  -- PyTorch nn.Linear weight layout
    wo_weight: (d_model, d_ff)  -- PyTorch nn.Linear weight layout
    Returns (wi_t, wo_t) = ((d_model, d_ff), (d_ff, d_model)).
    Optionally cast to `compute_dtype` (e.g. bf16) for the fast MXU path;
    accumulation inside the kernel is always f32.
    """
    wi_t = wi_weight.T
    wo_t = wo_weight.T
    if compute_dtype is not None:
        wi_t = wi_t.astype(compute_dtype)
        wo_t = wo_t.astype(compute_dtype)
    return wi_t, wo_t


def _t5_ff_kernel_resident(eps):
    """Single-k-step kernel: wi/wo fully VMEM-resident, no scratch."""

    def kernel(x_ref, lnw_ref, wi_ref, wo_ref, o_ref):
        x = x_ref[...].astype(jnp.float32)
        # T5LayerNorm: no mean subtraction, no bias; f32 on VPU/EUP.
        variance = jnp.mean(x * x, axis=-1, keepdims=True)
        nx = x * jax.lax.rsqrt(variance + eps)
        nx = (nx * lnw_ref[...].astype(jnp.float32)).astype(wi_ref.dtype)

        h = jnp.dot(nx, wi_ref[...], preferred_element_type=jnp.float32)
        h = jnp.maximum(h, 0.0)                      # ReLU (dropout = identity)
        y = jnp.dot(h.astype(wo_ref.dtype), wo_ref[...],
                    preferred_element_type=jnp.float32)
        o_ref[...] = (x + y).astype(o_ref.dtype)

    return kernel


def _t5_ff_kernel_streamed(eps, nk):
    """Multi-k-step kernel: d_ff streamed in tiles, f32 accumulator scratch."""

    def kernel(x_ref, lnw_ref, wi_ref, wo_ref, o_ref, norm_ref, acc_ref):
        k = pl.program_id(1)

        @pl.when(k == 0)
        def _norm():
            x = x_ref[...].astype(jnp.float32)
            variance = jnp.mean(x * x, axis=-1, keepdims=True)
            nx = x * jax.lax.rsqrt(variance + eps)
            nx = nx * lnw_ref[...].astype(jnp.float32)
            norm_ref[...] = nx.astype(norm_ref.dtype)

        # h_k = norm @ wi_t[:, k-tile]  -> (tm, tk);  f32 accumulate on the MXU.
        h = jnp.dot(norm_ref[...], wi_ref[...], preferred_element_type=jnp.float32)
        h = jnp.maximum(h, 0.0)
        # partial = h_k @ wo_t[k-tile, :] -> (tm, d_model)
        partial = jnp.dot(h.astype(wo_ref.dtype), wo_ref[...],
                          preferred_element_type=jnp.float32)

        @pl.when(k == 0)
        def _first():
            acc_ref[...] = partial

        @pl.when(jnp.logical_and(k > 0, k < nk - 1))
        def _mid():
            acc_ref[...] += partial

        @pl.when(k == nk - 1)
        def _last():
            # Fuse residual + final partial; no extra accumulator round-trip.
            o_ref[...] = (x_ref[...].astype(jnp.float32)
                          + acc_ref[...] + partial).astype(o_ref.dtype)

    return kernel


@functools.partial(jax.jit, static_argnames=("eps", "tm", "tk"))
def t5_layer_ff(hidden_states, ln_weight, wi_t, wo_t, *, eps=1e-6, tm=512, tk=None):
    """T5LayerFF forward.

    hidden_states: (B, S, d_model)
    ln_weight:     (d_model,)
    wi_t:          (d_model, d_ff)  -- pre-transposed (see prepare_t5_ff_weights)
    wo_t:          (d_ff, d_model)  -- pre-transposed
    tk=None -> auto (weights kept VMEM-resident when they fit the budget,
    otherwise streamed with the largest fitting 128-multiple divisor of d_ff).
    tk=int  -> force a streamed d_ff tile (snapped to a valid divisor).
    """
    B, S, d_model = hidden_states.shape
    d_ff = wi_t.shape[1]
    assert wi_t.shape == (d_model, d_ff), wi_t.shape
    assert wo_t.shape == (d_ff, d_model), wo_t.shape
    rows = B * S

    in_dtype = hidden_states.dtype
    w_dtype = wi_t.dtype
    in_isz = jnp.dtype(in_dtype).itemsize
    w_isz = jnp.dtype(w_dtype).itemsize

    vmem_budget = int(_VMEM_CAP * 0.55)   # tile-sizing budget (leaves headroom)
    vmem_limit = int(_VMEM_CAP * 0.70)    # compiler scoped-VMEM cap

    sub = {4: 8, 2: 16, 1: 32}.get(in_isz, 8)

    # --- row (token) tiling ---
    tm_eff = max(sub, min(tm, _round_up(rows, sub)))
    tm_eff = _round_up(tm_eff, sub)
    # Megacore: keep >= 2 row tiles on the "parallel" axis when rows allow.
    if rows >= 256 and _round_up(rows, tm_eff) // tm_eff < 2:
        tm_eff = _round_up(_cdiv(rows, 2), sub)
    rows_p = _round_up(rows, tm_eff)
    n_i = rows_p // tm_eff

    def vmem_need(tk_eff, n_k):
        xo = 2 * 2 * tm_eff * d_model * in_isz        # x + out blocks, double-buffered
        w = 2 * 2 * d_model * tk_eff * w_isz          # wi_t + wo_t blocks, double-buffered
        lnw = 2 * d_model * w_isz
        scr = tm_eff * d_model * (w_isz + 4) if n_k > 1 else 0
        h = tm_eff * tk_eff * 4                       # live f32 hidden tile
        return xo + w + lnw + scr + h

    # --- d_ff tiling: exact divisors only (no weight padding per call) ---
    if tk is not None:
        t = min(max(int(tk), 128), d_ff)
        t = (t // 128) * 128
        while t >= 128 and d_ff % t != 0:
            t -= 128
        tk_eff = t if t >= 128 else d_ff
    elif vmem_need(d_ff, 1) <= vmem_budget:
        tk_eff = d_ff                                  # weights fully VMEM-resident
    else:
        tk_eff = None
        for t in range((d_ff // 128) * 128, 0, -128):
            if d_ff % t == 0 and vmem_need(t, d_ff // t) <= vmem_budget:
                tk_eff = t
                break
        if tk_eff is None:
            tk_eff = d_ff                              # rare: d_ff not 128-aligned
    n_k = d_ff // tk_eff if d_ff % tk_eff == 0 else 1

    # --- activations (padding the token dim only; never the weights) ---
    x2d = hidden_states.reshape(rows, d_model)
    if rows_p != rows:
        x2d = jnp.pad(x2d, ((0, rows_p - rows), (0, 0)))
    lnw2d = ln_weight.reshape(1, d_model)

    weight_bytes = 2 * d_model * d_ff * w_isz
    cost = pl.CostEstimate(
        flops=int(4 * rows_p * d_model * d_ff + 6 * rows_p * d_model),
        transcendentals=int(rows_p),
        bytes_accessed=int(2 * rows_p * d_model * in_isz
                           + (1 if n_k == 1 else n_i) * weight_bytes
                           + d_model * w_isz),
    )
    out_shape = jax.ShapeDtypeStruct((rows_p, d_model), in_dtype)

    if n_k == 1:
        out2d = pl.pallas_call(
            _t5_ff_kernel_resident(eps),
            out_shape=out_shape,
            grid_spec=pltpu.PrefetchScalarGridSpec(
                num_scalar_prefetch=0,
                grid=(n_i,),
                in_specs=[
                    pl.BlockSpec((tm_eff, d_model), lambda i: (i, 0)),   # x
                    pl.BlockSpec((1, d_model), lambda i: (0, 0)),        # ln weight
                    pl.BlockSpec((d_model, d_ff), lambda i: (0, 0)),     # wi_t (resident)
                    pl.BlockSpec((d_ff, d_model), lambda i: (0, 0)),     # wo_t (resident)
                ],
                out_specs=pl.BlockSpec((tm_eff, d_model), lambda i: (i, 0)),
            ),
            compiler_params=pltpu.CompilerParams(
                dimension_semantics=("parallel",),
                vmem_limit_bytes=vmem_limit,
            ),
            cost_estimate=cost,
        )(x2d, lnw2d, wi_t, wo_t)
    else:
        out2d = pl.pallas_call(
            _t5_ff_kernel_streamed(eps, n_k),
            out_shape=out_shape,
            grid_spec=pltpu.PrefetchScalarGridSpec(
                num_scalar_prefetch=0,
                grid=(n_i, n_k),
                in_specs=[
                    pl.BlockSpec((tm_eff, d_model), lambda i, k: (i, 0)),   # x
                    pl.BlockSpec((1, d_model), lambda i, k: (0, 0)),        # ln weight
                    pl.BlockSpec((d_model, tk_eff), lambda i, k: (0, k)),   # wi_t slice
                    pl.BlockSpec((tk_eff, d_model), lambda i, k: (k, 0)),   # wo_t slice
                ],
                out_specs=pl.BlockSpec((tm_eff, d_model), lambda i, k: (i, 0)),
                scratch_shapes=[
                    pltpu.VMEM((tm_eff, d_model), w_dtype),                 # norm_x
                    pltpu.VMEM((tm_eff, d_model), jnp.float32),             # accumulator
                ],
            ),
            compiler_params=pltpu.CompilerParams(
                dimension_semantics=("parallel", "arbitrary"),
                vmem_limit_bytes=vmem_limit,
            ),
            cost_estimate=cost,
        )(x2d, lnw2d, wi_t, wo_t)

    if rows_p != rows:
        out2d = out2d[:rows]
    return out2d.reshape(B, S, d_model)


def _reference(hidden_states, ln_weight, wi_weight, wo_weight, eps=1e-6):
    x = hidden_states.astype(jnp.float32)
    variance = jnp.mean(x * x, axis=-1, keepdims=True)
    norm_x = ln_weight.astype(jnp.float32) * (x / jnp.sqrt(variance + eps))
    h = norm_x @ wi_weight.astype(jnp.float32).T
    h = jnp.maximum(h, 0.0)
    y = h @ wo_weight.astype(jnp.float32).T
    return x + y


def _make_inputs(key, B, S, d_model, d_ff, dtype):
    k_x, k_wi, k_wo = jax.random.split(key, 3)
    hidden = jax.random.normal(k_x, (B, S, d_model), jnp.float32).astype(dtype)
    lnw = jnp.ones((d_model,), dtype)
    wi = (jax.random.normal(k_wi, (d_ff, d_model), jnp.float32) * 0.05).astype(dtype)
    wo = (jax.random.normal(k_wo, (d_model, d_ff), jnp.float32) * 0.05).astype(dtype)
    return hidden, lnw, wi, wo


if __name__ == "__main__":
    key = jax.random.PRNGKey(0)
    k1, k2, k3 = jax.random.split(key, 3)
    eps = 1e-6

    # Test 1: f32, d_ff not a multiple of 128 (160) -> falls back to the
    # VMEM-resident single-step path (no weight padding anywhere).
    h, lnw, wi, wo = _make_inputs(k1, 2, 8, 64, 160, jnp.float32)
    wi_t, wo_t = prepare_t5_ff_weights(wi, wo)
    out = jax.block_until_ready(t5_layer_ff(h, lnw, wi_t, wo_t, eps=eps))
    ref = _reference(h, lnw, wi, wo, eps=eps)
    assert out.shape == h.shape
    assert jnp.allclose(out, ref, atol=1e-4, rtol=1e-4), "test1 mismatch"

    # Test 2: f32, ragged token count (15 rows -> padded to 16), resident weights.
    h, lnw, wi, wo = _make_inputs(k2, 3, 5, 128, 256, jnp.float32)
    wi_t, wo_t = prepare_t5_ff_weights(wi, wo)
    out = jax.block_until_ready(t5_layer_ff(h, lnw, wi_t, wo_t, eps=eps))
    ref = _reference(h, lnw, wi, wo, eps=eps)
    assert out.shape == h.shape
    assert jnp.allclose(out, ref, atol=1e-4, rtol=1e-4), "test2 mismatch"

    # Test 3: bf16 inputs + bf16 weights (bf16 MXU path, f32 accumulate),
    # forced d_ff streaming with tk=128 -> 3 k steps (exercises the accumulator path).
    h, lnw, wi, wo = _make_inputs(k3, 2, 8, 128, 384, jnp.bfloat16)
    wi_t, wo_t = prepare_t5_ff_weights(wi, wo)
    out = jax.block_until_ready(t5_layer_ff(h, lnw, wi_t, wo_t, eps=eps, tk=128))
    ref = _reference(h, lnw, wi, wo, eps=eps)
    assert out.shape == h.shape
    assert jnp.allclose(out.astype(jnp.float32), ref, atol=1e-1, rtol=1e-1), "test3 mismatch"

    print("KERNEL_OK")
</pallas_src>

<mosaic_0001>
module attributes {stable_mosaic.version = 11 : i64} {
  func.func @kernel(%arg0: i32, %arg1: memref<16x64xf32, #tpu.memory_space<vmem>>, %arg2: memref<1x64xf32, #tpu.memory_space<vmem>>, %arg3: memref<64x160xf32, #tpu.memory_space<vmem>>, %arg4: memref<160x64xf32, #tpu.memory_space<vmem>>, %arg5: memref<16x64xf32, #tpu.memory_space<vmem>>) attributes {dimension_semantics = [#tpu.dimension_semantics<parallel>], iteration_bounds = array<i64: 1>, scalar_prefetch = 0 : i64, scratch_operands = 0 : i64, tpu.core_type = #tpu.core_type<tc>, window_params = [{transform_indices = @transform_0, window_bounds = array<i64: 16, 64>}, {pipeline_mode = #tpu.pipeline_mode<synchronous>, transform_indices = @transform_1, window_bounds = array<i64: 1, 64>}, {pipeline_mode = #tpu.pipeline_mode<synchronous>, transform_indices = @transform_2, window_bounds = array<i64: 64, 160>}, {pipeline_mode = #tpu.pipeline_mode<synchronous>, transform_indices = @transform_3, window_bounds = array<i64: 160, 64>}, {transform_indices = @transform_4, window_bounds = array<i64: 16, 64>}]} {
    %c0 = arith.constant 0 : index
    %c0_0 = arith.constant 0 : index
    %0 = vector.load %arg1[%c0, %c0_0] : memref<16x64xf32, #tpu.memory_space<vmem>>, vector<16x64xf32>
    %1 = arith.mulf %0, %0 : vector<16x64xf32>
    %cst = arith.constant dense<0.000000e+00> : vector<16xf32>
    %2 = vector.multi_reduction <add>, %1, %cst [1] : vector<16x64xf32> to vector<16xf32>
    %3 = vector.shape_cast %2 : vector<16xf32> to vector<16x1xf32>
    %cst_1 = arith.constant 6.400000e+01 : f32
    %4 = vector.broadcast %cst_1 : f32 to vector<16x1xf32>
    %5 = arith.divf %3, %4 : vector<16x1xf32>
    %cst_2 = arith.constant 9.99999997E-7 : f32
    %6 = vector.broadcast %cst_2 : f32 to vector<16x1xf32>
    %7 = arith.addf %5, %6 : vector<16x1xf32>
    %8 = math.rsqrt %7 : vector<16x1xf32>
    %9 = vector.broadcast %8 : vector<16x1xf32> to vector<16x64xf32>
    %10 = arith.mulf %0, %9 : vector<16x64xf32>
    %c0_3 = arith.constant 0 : index
    %c0_4 = arith.constant 0 : index
    %11 = vector.load %arg2[%c0_3, %c0_4] : memref<1x64xf32, #tpu.memory_space<vmem>>, vector<1x64xf32>
    %12 = vector.broadcast %11 : vector<1x64xf32> to vector<16x64xf32>
    %13 = arith.mulf %10, %12 : vector<16x64xf32>
    %c0_5 = arith.constant 0 : index
    %c0_6 = arith.constant 0 : index
    %14 = vector.load %arg3[%c0_5, %c0_6] : memref<64x160xf32, #tpu.memory_space<vmem>>, vector<64x160xf32>
    %cst_7 = arith.constant dense<0.000000e+00> : vector<16x160xf32>
    %15 = tpu.matmul %13, %14, %cst_7 {dimension_numbers = #tpu.dot_dimension_numbers<[1], [0], [0], [1], [0, 0, 1, 1], [], []>} : vector<16x64xf32>, vector<64x160xf32>, vector<16x160xf32> -> vector<16x160xf32>
    %cst_8 = arith.constant 0.000000e+00 : f32
    %16 = vector.broadcast %cst_8 : f32 to vector<16x160xf32>
    %17 = arith.maximumf %15, %16 : vector<16x160xf32>
    %c0_9 = arith.constant 0 : index
    %c0_10 = arith.constant 0 : index
    %18 = vector.load %arg4[%c0_9, %c0_10] : memref<160x64xf32, #tpu.memory_space<vmem>>, vector<160x64xf32>
    %cst_11 = arith.constant dense<0.000000e+00> : vector<16x64xf32>
    %19 = tpu.matmul %17, %18, %cst_11 {dimension_numbers = #tpu.dot_dimension_numbers<[1], [0], [0], [1], [0, 0, 1, 1], [], []>} : vector<16x160xf32>, vector<160x64xf32>, vector<16x64xf32> -> vector<16x64xf32>
    %20 = arith.addf %0, %19 : vector<16x64xf32>
    %c0_12 = arith.constant 0 : index
    %c0_13 = arith.constant 0 : index
    %21 = vector.load %arg5[%c0_12, %c0_13] : memref<16x64xf32, #tpu.memory_space<vmem>>, vector<16x64xf32>
    tpu.vector_store %arg5[%c0_12, %c0_13], %20 {strides = array<i32>} : memref<16x64xf32, #tpu.memory_space<vmem>>, vector<16x64xf32>,
    return
  }
  func.func @transform_0(%arg0: i32) -> (i32, i32) {
    %c0_i32 = arith.constant 0 : i32
    %c0_i32_0 = arith.constant 0 : i32
    return %arg0, %c0_i32 : i32, i32
  }
  func.func @transform_1(%arg0: i32) -> (i32, i32) {
    %c0_i32 = arith.constant 0 : i32
    %c0_i32_0 = arith.constant 0 : i32
    %c0_i32_1 = arith.constant 0 : i32
    return %c0_i32, %c0_i32_0 : i32, i32
  }
  func.func @transform_2(%arg0: i32) -> (i32, i32) {
    %c0_i32 = arith.constant 0 : i32
    %c0_i32_0 = arith.constant 0 : i32
    %c0_i32_1 = arith.constant 0 : i32
    return %c0_i32, %c0_i32_0 : i32, i32
  }
  func.func @transform_3(%arg0: i32) -> (i32, i32) {
    %c0_i32 = arith.constant 0 : i32
    %c0_i32_0 = arith.constant 0 : i32
    %c0_i32_1 = arith.constant 0 : i32
    return %c0_i32, %c0_i32_0 : i32, i32
  }
  func.func @transform_4(%arg0: i32) -> (i32, i32) {
    %c0_i32 = arith.constant 0 : i32
    %c0_i32_0 = arith.constant 0 : i32
    return %arg0, %c0_i32 : i32, i32
  }
}

</mosaic_0001>

<llo_original>
// kernel: t5_layer_ff.1
$region0: #{t5_layer_ff.1}
  #allocation0 [shape = 'u32[]', space=smem, size = 0x4, offset = 0x4, fixed_abs, tag = 'smem constant byte address 0x4 - core index']
  #allocation1 [shape = 'u32[144,128]{1,0:T(1,128)}', space=vmem, size = 0x12000, scoped, tag = 'internal scratch']
  %s0 = inlined_call_operand.vmem [shape: f32[16,64], index: 0, kind: input, shape index: {}]
  %s1 = inlined_call_operand.vmem [shape: f32[1,64], index: 1, kind: input, shape index: {}]
  %s2 = inlined_call_operand.vmem [shape: f32[64,160], index: 2, kind: input, shape index: {}]
  %s3 = inlined_call_operand.vmem [shape: f32[160,64], index: 3, kind: input, shape index: {}]
  %s4 = inlined_call_operand.hbm [shape: f32[16,64], index: 4, kind: output, shape index: {}]
  %s5 = sld [smem:[#allocation0]]
  $region26: #{t5_layer_ff.1} parent=0
    _
  %s7 = ssub.s32 1, %s5
  %s8 = scalar_select 0, %s7, %s5
  $region1: #{t5_layer_ff.1} parent=0
    #allocation2 [shape = 'u8[8192]{0}', space=vmem, size = 0x2000, scoped, tag = 'output window, operand 0, single buffered']
    #allocation3 [shape = 's32[1]{0}', space=sflag, size = 0x4, scoped, tag = 'scoped memory for t5_layer_ff.1']
    %9 = vsyncpa [#allocation3], 0
    // Predicated region
    $region2: #{t5_layer_ff.1} parent=1 // pred_check
      _
    $region3: #{t5_layer_ff.1} parent=1 // pred_check_branch
      %11 = sbr.rel (0) target = $region5
    $region4: #{t5_layer_ff.1} parent=1 // pred_region
      _
    $region5: #{t5_layer_ff.1} parent=1 // pred_fallthru
      _
    // Predicated region
    $region6: #{t5_layer_ff.1} parent=1 // pred_check
      _
    $region7: #{t5_layer_ff.1} parent=1 // pred_check_branch
      %13 = sbr.rel (0) target = $region9
    $region8: #{t5_layer_ff.1} parent=1 // pred_region
      _
    $region9: #{t5_layer_ff.1} parent=1 // pred_fallthru
      _
    // Predicated region
    $region10: #{t5_layer_ff.1} parent=1 // pred_check
      _
    $region11: #{t5_layer_ff.1} parent=1 // pred_check_branch
      %15 = sbr.rel (0) target = $region13
    $region12: #{t5_layer_ff.1} parent=1 // pred_region
      _
    $region13: #{t5_layer_ff.1} parent=1 // pred_fallthru
      _
    // Predicated region
    $region14: #{t5_layer_ff.1} parent=1 // pred_check
      _
    $region15: #{t5_layer_ff.1} parent=1 // pred_check_branch
      %17 = sbr.rel (0) target = $region17
    $region16: #{t5_layer_ff.1} parent=1 // pred_region
      _
    $region17: #{t5_layer_ff.1} parent=1 // pred_fallthru
      _
    %v18 = vld [vmem:[%s0] sm:$0xff]
    %v19 = vld [vmem:[%s0 + $0x8] sm:$0xff]
    %v20 = vmul.f32 %v18, %v18
    %v21 = vmul.f32 %v19, %v19
    %vm22 = vcmask 523264
    %v23 = vsel %vm22, %v20, 0.0
    %24 = vadd.xlane.f32.xlu0 %v23
    %v25 = vpop.xlane.xlu0 %24
    %v26 = vsel %vm22, %v21, 0.0
    %27 = vadd.xlane.f32.xlu0 %v26
    %v28 = vpop.xlane.xlu0 %27
    %v29 = vrcp.pop 64.0
    %v30 = vmul.f32 %v25, %v29
    %v31 = vmul.f32 %v28, %v29
    %v32 = vadd.f32 %v30, 1e-06
    %v33 = vadd.f32 %v31, 1e-06
    %v34 = vrsqrt.pop %v32
    %v35 = vrsqrt.pop %v33
    %v36 = vmul.f32 %v18, %v34
    %v37 = vmul.f32 %v19, %v35
    %v38 = vld [vmem:[%s1] sm:$0x1]
    %v40 = vlaneseq
    %v41 = vshrl.u32 %v40, 7
    %v42 = vsub.s32 0, %v41
    %v43 = vrot.slane %v38, %v42
    %v45 = vmul.f32 %v36, %v43
    %v46 = vmul.f32 %v37, %v43
    %v47 = vld [vmem:[%s2] sm:$0xff]
    %v48 = vld [vmem:[%s2 + $0x8] sm:$0xff]
    %v49 = vld [vmem:[%s2 + $0x10] sm:$0xff]
    %v50 = vld [vmem:[%s2 + $0x18] sm:$0xff]
    %v51 = vld [vmem:[%s2 + $0x20] sm:$0xff]
    %v52 = vld [vmem:[%s2 + $0x28] sm:$0xff]
    %v53 = vld [vmem:[%s2 + $0x30] sm:$0xff]
    %v54 = vld [vmem:[%s2 + $0x38] sm:$0xff]
    %v55 = vld [vmem:[%s2 + $0x40] sm:$0xff]
    %v56 = vld [vmem:[%s2 + $0x48] sm:$0xff]
    %v57 = vld [vmem:[%s2 + $0x50] sm:$0xff]
    %v58 = vld [vmem:[%s2 + $0x58] sm:$0xff]
    %v59 = vld [vmem:[%s2 + $0x60] sm:$0xff]
    %v60 = vld [vmem:[%s2 + $0x68] sm:$0xff]
    %v61 = vld [vmem:[%s2 + $0x70] sm:$0xff]
    %v62 = vld [vmem:[%s2 + $0x78] sm:$0xff]
    %v64 = vsel %vm22, %v45, 0
    %v67 = vsel %vm22, %v46, 0
    %69 = vmatprep.subr.mxu0 0.0
    %70 = vmatpush1.msra.mxu0 0.0
    %71 = vmatprep.subr.mxu0 0.0
    %72 = vmatpush1.msra.mxu0 0.0
    %73 = vmatprep.subr.mxu0 0.0
    %74 = vmatpush1.msra.mxu0 0.0
    %75 = vmatprep.subr.mxu0 0.0
    %76 = vmatpush1.msra.mxu0 0.0
    %77 = vmatprep.subr.mxu0 0.0
    %78 = vmatpush1.msra.mxu0 0.0
    %79 = vmatprep.subr.mxu0 0.0
    %80 = vmatpush1.msra.mxu0 0.0
    %81 = vmatprep.subr.mxu0 0.0
    %82 = vmatpush1.msra.mxu0 0.0
    %83 = vmatprep.subr.mxu0 0.0
    %84 = vmatpush1.msra.mxu0 0.0
    %85 = vmatprep.subr.mxu0 %v62
    %86 = vmatpush1.msra.mxu0 %v61
    %87 = vmatprep.subr.mxu0 %v60
    %88 = vmatpush1.msra.mxu0 %v59
    %89 = vmatprep.subr.mxu0 %v58
    %90 = vmatpush1.msra.mxu0 %v57
    %91 = vmatprep.subr.mxu0 %v56
    %92 = vmatpush1.msra.mxu0 %v55
    %93 = vmatprep.subr.mxu0 %v54
    %94 = vmatpush1.msra.mxu0 %v53
    %95 = vmatprep.subr.mxu0 %v52
    %96 = vmatpush1.msra.mxu0 %v51
    %97 = vmatprep.subr.mxu0 %v50
    %98 = vmatpush1.msra.mxu0 %v49
    %99 = vmatprep.subr.mxu0 %v48
    %100 = vmatpush1.msra.mxu0 %v47
    %101 = vmatprep.subr.mxu0 0.0
    %102 = vmatpush2.msra.mxu0 0.0
    %103 = vmatprep.subr.mxu0 0.0
    %104 = vmatpush2.msra.mxu0 0.0
    %105 = vmatprep.subr.mxu0 0.0
    %106 = vmatpush2.msra.mxu0 0.0
    %107 = vmatprep.subr.mxu0 0.0
    %108 = vmatpush2.msra.mxu0 0.0
    %109 = vmatprep.subr.mxu0 0.0
    %110 = vmatpush2.msra.mxu0 0.0
    %111 = vmatprep.subr.mxu0 0.0
    %112 = vmatpush2.msra.mxu0 0.0
    %113 = vmatprep.subr.mxu0 0.0
    %114 = vmatpush2.msra.mxu0 0.0
    %115 = vmatprep.subr.mxu0 0.0
    %116 = vmatpush2.msra.mxu0 0.0
    %117 = vmatprep.subr.mxu0 0.0
    %118 = vmatpush2.msra.mxu0 0.0
    %119 = vmatprep.subr.mxu0 0.0
    %120 = vmatpush2.msra.mxu0 0.0
    %121 = vmatprep.subr.mxu0 0.0
    %122 = vmatpush2.msra.mxu0 0.0
    %123 = vmatprep.subr.mxu0 0.0
    %124 = vmatpush2.msra.mxu0 0.0
    %125 = vmatprep.subr.mxu0 0.0
    %126 = vmatpush2.msra.mxu0 0.0
    %127 = vmatprep.subr.mxu0 0.0
    %128 = vmatpush2.msra.mxu0 0.0
    %129 = vmatprep.subr.mxu0 0.0
    %130 = vmatpush2.msra.mxu0 0.0
    %131 = vmatprep.subr.mxu0 0.0
    %132 = vmatpush2.msra.mxu0 0.0
    %133 = vmatprep.mubr.f32.mxu0 0.0
    %134 = vmatmul.mubr.f32.gmra.mxu0 %v64
    %v135 = vpop.f32.mrf.mxu0
    %v136 = vadd.f32 0.0, %v135
    %v137 = vpop.f32.mrf.mxu0
    %v138 = vadd.f32 0.0, %v137
    %139 = vmatprep.mubr.f32.mxu0 0.0
    %140 = vmatmul.mubr.f32.gmra.mxu0 %v67
    %v141 = vpop.f32.mrf.mxu0
    %v142 = vadd.f32 0.0, %v141
    %v143 = vpop.f32.mrf.mxu0
    %v144 = vadd.f32 0.0, %v143
    %145 = vdwg.mxu0
    %v146 = vmax.f32 %v136, 0.0
    %v147 = vmax.f32 %v138, 0.0
    %v148 = vmax.f32 %v142, 0.0
    %v149 = vmax.f32 %v144, 0.0
    %v150 = vld [vmem:[%s3] sm:$0xff]
    %v151 = vld [vmem:[%s3 + $0x8] sm:$0xff]
    %v152 = vld [vmem:[%s3 + $0x10] sm:$0xff]
    %v153 = vld [vmem:[%s3 + $0x18] sm:$0xff]
    %v154 = vld [vmem:[%s3 + $0x20] sm:$0xff]
    %v155 = vld [vmem:[%s3 + $0x28] sm:$0xff]
    %v156 = vld [vmem:[%s3 + $0x30] sm:$0xff]
    %v157 = vld [vmem:[%s3 + $0x38] sm:$0xff]
    %v158 = vld [vmem:[%s3 + $0x40] sm:$0xff]
    %v159 = vld [vmem:[%s3 + $0x48] sm:$0xff]
    %v160 = vld [vmem:[%s3 + $0x50] sm:$0xff]
    %v161 = vld [vmem:[%s3 + $0x58] sm:$0xff]
    %v162 = vld [vmem:[%s3 + $0x60] sm:$0xff]
    %v163 = vld [vmem:[%s3 + $0x68] sm:$0xff]
    %v164 = vld [vmem:[%s3 + $0x70] sm:$0xff]
    %v165 = vld [vmem:[%s3 + $0x78] sm:$0xff]
    %v166 = vld [vmem:[%s3 + $0x80] sm:$0xff]
    %v167 = vld [vmem:[%s3 + $0x88] sm:$0xff]
    %v168 = vld [vmem:[%s3 + $0x90] sm:$0xff]
    %v169 = vld [vmem:[%s3 + $0x98] sm:$0xff]
    %vm170 = vcmask 261120
    %v172 = vsel %vm170, %v147, 0
    %v175 = vsel %vm170, %v149, 0
    %177 = vmatprep.subr.mxu0 0.0
    %178 = vmatpush1.msra.mxu0 %v165
    %179 = vmatprep.subr.mxu0 0.0
    %180 = vmatpush1.msra.mxu0 %v164
    %181 = vmatprep.subr.mxu0 0.0
    %182 = vmatpush1.msra.mxu0 %v163
    %183 = vmatprep.subr.mxu0 0.0
    %184 = vmatpush1.msra.mxu0 %v162
    %185 = vmatprep.subr.mxu0 0.0
    %186 = vmatpush1.msra.mxu0 %v161
    %187 = vmatprep.subr.mxu0 0.0
    %188 = vmatpush1.msra.mxu0 %v160
    %189 = vmatprep.subr.mxu0 0.0
    %190 = vmatpush1.msra.mxu0 %v159
    %191 = vmatprep.subr.mxu0 0.0
    %192 = vmatpush1.msra.mxu0 %v158
    %193 = vmatprep.subr.mxu0 0.0
    %194 = vmatpush1.msra.mxu0 %v157
    %195 = vmatprep.subr.mxu0 0.0
    %196 = vmatpush1.msra.mxu0 %v156
    %197 = vmatprep.subr.mxu0 0.0
    %198 = vmatpush1.msra.mxu0 %v155
    %199 = vmatprep.subr.mxu0 0.0
    %200 = vmatpush1.msra.mxu0 %v154
    %201 = vmatprep.subr.mxu0 0.0
    %202 = vmatpush1.msra.mxu0 %v153
    %203 = vmatprep.subr.mxu0 0.0
    %204 = vmatpush1.msra.mxu0 %v152
    %205 = vmatprep.subr.mxu0 0.0
    %206 = vmatpush1.msra.mxu0 %v151
    %207 = vmatprep.subr.mxu0 0.0
    %208 = vmatpush1.msra.mxu0 %v150
    %209 = vmatprep.subr.mxu0 0.0
    %210 = vmatpush2.msra.mxu0 0.0
    %211 = vmatprep.subr.mxu0 0.0
    %212 = vmatpush2.msra.mxu0 0.0
    %213 = vmatprep.subr.mxu0 0.0
    %214 = vmatpush2.msra.mxu0 0.0
    %215 = vmatprep.subr.mxu0 0.0
    %216 = vmatpush2.msra.mxu0 0.0
    %217 = vmatprep.subr.mxu0 0.0
    %218 = vmatpush2.msra.mxu0 0.0
    %219 = vmatprep.subr.mxu0 0.0
    %220 = vmatpush2.msra.mxu0 0.0
    %221 = vmatprep.subr.mxu0 0.0
    %222 = vmatpush2.msra.mxu0 0.0
    %223 = vmatprep.subr.mxu0 0.0
    %224 = vmatpush2.msra.mxu0 0.0
    %225 = vmatprep.subr.mxu0 0.0
    %226 = vmatpush2.msra.mxu0 0.0
    %227 = vmatprep.subr.mxu0 0.0
    %228 = vmatpush2.msra.mxu0 0.0
    %229 = vmatprep.subr.mxu0 0.0
    %230 = vmatpush2.msra.mxu0 0.0
    %231 = vmatprep.subr.mxu0 0.0
    %232 = vmatpush2.msra.mxu0 0.0
    %233 = vmatprep.subr.mxu0 0.0
    %234 = vmatpush2.msra.mxu0 %v169
    %235 = vmatprep.subr.mxu0 0.0
    %236 = vmatpush2.msra.mxu0 %v168
    %237 = vmatprep.subr.mxu0 0.0
    %238 = vmatpush2.msra.mxu0 %v167
    %239 = vmatprep.subr.mxu0 0.0
    %240 = vmatpush2.msra.mxu0 %v166
    %241 = vmatprep.mubr.f32.mxu0 %v172
    %242 = vmatmul.mubr.f32.gmra.mxu0 %v146
    %v243 = vpop.f32.mrf.mxu0
    %v244 = vadd.f32 0.0, %v243
    %v245 = vpop.f32.mrf.mxu0
    %246 = vmatprep.mubr.f32.mxu0 %v175
    %247 = vmatmul.mubr.f32.gmra.mxu0 %v148
    %v248 = vpop.f32.mrf.mxu0
    %v249 = vadd.f32 0.0, %v248
    %v250 = vpop.f32.mrf.mxu0
    %251 = vdwg.mxu0
    %v252 = vadd.f32 %v18, %v244
    %v253 = vadd.f32 %v19, %v249
    %254 = vst.msk [vmem:[#allocation2] sm:$0xff] %vm22, %v252
    %255 = vst.msk [vmem:[#allocation2 + $0x8] sm:$0xff] %vm22, %v253
    // Predicated region
    $region18: #{t5_layer_ff.1} parent=1 // pred_check
      _
    $region19: #{t5_layer_ff.1} parent=1 // pred_check_branch
      %257 = sbr.rel (0) target = $region21
    $region20: #{t5_layer_ff.1} parent=1 // pred_region
      %s259 = ssub.s32 256, 256
      %260 = vsyncadd [#allocation3], %s259
      %s261 = sshll.u32 [#allocation2], 4
      %s262 = int_to_ptr.vmem [resolvable:$true] %s261
      %267 = dma.vmem_to_hbm [thread:$0]  %s262, 256, %s4, [#allocation3], 128, 128, 8
    $region21: #{t5_layer_ff.1} parent=1 // pred_fallthru
      _
    // Predicated region
    $region22: #{t5_layer_ff.1} parent=1 // pred_check
      _
    $region23: #{t5_layer_ff.1} parent=1 // pred_check_branch
      %269 = sbr.rel (0) target = $region25
    $region24: #{t5_layer_ff.1} parent=1 // pred_region
      %270 = dma.done [#allocation3], 256
    $region25: #{t5_layer_ff.1} parent=1 // pred_fallthru
      _
    %271 = vsyncpa [#allocation3], 1

</llo_original>
